<compile_context>
chip_gen: v7x
topology: tpu7x:2x2x1
jax: 0.10.0
libtpu: 0.0.40
codegen_flags: <defaults>
</compile_context>

<pallas_src>
import functools

import jax
import jax.numpy as jnp
from jax.experimental import pallas as pl
from jax.experimental.pallas import tpu as pltpu

HIDDEN = 200


def _ceil_to(x, m):
    return ((x + m - 1) // m) * m


def vae_kernel(xe_ref, p_ref, out_ref, *, off, L, CP, LP, HP):
    """One batch tile of the full VAE forward.

    All parameters come from a single packed bf16 VMEM buffer `p_ref`
    addressed with static (offset, size) slices; offsets are multiples of 16
    rows (bf16 sublane tile) and all column widths are multiples of 128 lanes.
    MXU operands are bf16, accumulation and all elementwise math is f32.
    """
    bf = jnp.bfloat16

    def w(name, rows, cols):
        return p_ref[pl.ds(off[name], rows), pl.ds(0, cols)]            # bf16

    def b(name, cols):
        return p_ref[pl.ds(off[name], 1), pl.ds(0, cols)].astype(jnp.float32)

    xe = xe_ref[...]                 # (TB, CP+LP) f32
    x = xe[:, :CP]                   # zero-padded input
    eps_hi = xe[:, CP:]              # (TB, LP): eps pre-shifted to lanes [L:2L]

    # ----- Encoder -----
    h = jnp.maximum(
        jnp.dot(x.astype(bf), w("we1", CP, HP),
                preferred_element_type=jnp.float32) + b("be1", HP), 0.0)
    h = jnp.maximum(
        jnp.dot(h.astype(bf), w("we2", HP, HP),
                preferred_element_type=jnp.float32) + b("be2", HP), 0.0)

    # Fused mu|logsigma head in a single 128-lane block:
    # mu at lanes [0:L], logsigma at lanes [L:2L], zeros elsewhere.
    muls = (jnp.dot(h.astype(bf), w("wmuls", HP, LP),
                    preferred_element_type=jnp.float32) + b("bmuls", LP))

    # ----- Reparameterization: z = eps * exp(logsigma) + mu -----
    # eps*exp(logsigma) lives at lanes [L:2L]; one XLU lane roll realigns it
    # with mu at lanes [0:L].  After the add, lanes [L:2L] of z carry logsigma,
    # which is inert because wd1 rows [L:LP) are zero padding.
    z = pltpu.roll(eps_hi * jnp.exp(muls), shift=LP - L, axis=1) + muls

    # ----- Decoder -----
    d = jnp.maximum(
        jnp.dot(z.astype(bf), w("wd1", LP, HP),
                preferred_element_type=jnp.float32) + b("bd1", HP), 0.0)
    d = jnp.maximum(
        jnp.dot(d.astype(bf), w("wd2", HP, HP),
                preferred_element_type=jnp.float32) + b("bd2", HP), 0.0)
    d = jnp.maximum(
        jnp.dot(d.astype(bf), w("wd3", HP, CP),
                preferred_element_type=jnp.float32) + b("bd3", CP), 0.0)
    recon = jax.nn.sigmoid(d)        # matches PyTorch: sigmoid(relu(fc_dec3(x)))

    # Lane-dense packed output: [recon (CP) | mu,logsigma (LP)].
    out_ref[:, :CP] = recon
    out_ref[:, CP:] = muls


def pack_params(params, in_channels, latent_size, hidden, CP, LP, HP, WP):
    """Zero-pad and stack all weights/biases into one (R, WP) bf16 buffer.

    Weights are stored as (in, out).  Returns (packed, offsets) where offsets
    are static row indices (all multiples of 16, the bf16 sublane tile).
    """
    H, C, L = hidden, in_channels, latent_size
    assert 2 * L <= LP, "fused mu|logsigma head requires 2*latent_size <= 128"

    # Fused mu|logsigma weight/bias inside ONE 128-lane block.
    w_muls = jnp.zeros((H, LP), jnp.float32)
    w_muls = w_muls.at[:, :L].set(params["wmu"])
    w_muls = w_muls.at[:, L:2 * L].set(params["wls"])
    b_muls = jnp.zeros((1, LP), jnp.float32)
    b_muls = b_muls.at[:, :L].set(params["bmu"])
    b_muls = b_muls.at[:, L:2 * L].set(params["bls"])

    blocks, off = [], {}
    row = 0
    BIAS_ROWS = 16   # keep every block offset a multiple of the bf16 sublane tile

    def add(name, arr, rows):
        nonlocal row
        blk = jnp.zeros((rows, WP), jnp.bfloat16)
        blk = blk.at[:arr.shape[0], :arr.shape[1]].set(arr.astype(jnp.bfloat16))
        blocks.append(blk)
        off[name] = row
        row += rows

    add("we1", params["we1"], CP)    # (C, H)
    add("we2", params["we2"], HP)    # (H, H)
    add("wmuls", w_muls, HP)         # (H, LP)
    add("wd1", params["wd1"], LP)    # (L, H)
    add("wd2", params["wd2"], HP)    # (H, H)
    add("wd3", params["wd3"], HP)    # (H, C)
    add("be1", params["be1"], BIAS_ROWS)
    add("be2", params["be2"], BIAS_ROWS)
    add("bmuls", b_muls, BIAS_ROWS)
    add("bd1", params["bd1"], BIAS_ROWS)
    add("bd2", params["bd2"], BIAS_ROWS)
    add("bd3", params["bd3"], BIAS_ROWS)

    return jnp.concatenate(blocks, axis=0), off


def build_vae_forward(params, in_channels, latent_size, *, hidden=HIDDEN,
                      batch_tile=512):
    """Packs parameters once and returns a jitted fwd(x, eps) callable."""
    C, L = in_channels, latent_size
    CP = _ceil_to(C, 128)
    LP = _ceil_to(L, 128)
    HP = _ceil_to(hidden, 128)
    WP = max(HP, CP, LP)
    INW = CP + LP
    OUTW = CP + LP

    # Packed once (not in the per-call path).
    packed, off = pack_params(params, C, L, hidden, CP, LP, HP, WP)
    R = packed.shape[0]

    kernel = functools.partial(vae_kernel, off=off, L=L, CP=CP, LP=LP, HP=HP)

    @jax.jit
    def fwd(packed_buf, x, eps):
        B = x.shape[0]
        TB = min(batch_tile, _ceil_to(B, 8))
        # Keep >= 2 batch tiles when B allows it so the "parallel" grid axis
        # can split across both TensorCores on multi-TC chips (v7x).
        TB = max(8, min(TB, _ceil_to(-(-B // 2), 8)))
        BP = _ceil_to(B, TB)
        nb = BP // TB

        # Single input slab: x at lanes [0:C], eps pre-shifted to [CP+L:CP+2L].
        xe = jnp.zeros((BP, INW), jnp.float32)
        xe = xe.at[:B, :C].set(x)
        xe = xe.at[:B, CP + L:CP + 2 * L].set(eps)

        out = pl.pallas_call(
            kernel,
            out_shape=jax.ShapeDtypeStruct((BP, OUTW), jnp.float32),
            grid_spec=pltpu.PrefetchScalarGridSpec(
                num_scalar_prefetch=0,
                grid=(nb,),
                in_specs=[
                    pl.BlockSpec((TB, INW), lambda i: (i, 0)),   # x|eps tile
                    # Resident packed params (constant index map -> one DMA).
                    # TODO(synk): pipeline_mode=pl.Buffered(1) would drop the
                    # unused second param buffer if supported by this JAX build.
                    pl.BlockSpec((R, WP), lambda i: (0, 0)),
                ],
                out_specs=pl.BlockSpec((TB, OUTW), lambda i: (i, 0)),
            ),
            compiler_params=pltpu.CompilerParams(
                dimension_semantics=("parallel",),
            ),
        )(xe, packed_buf)

        recon = out[:B, :C]
        mu = out[:B, CP:CP + L]
        logsigma = out[:B, CP + L:CP + 2 * L]
        return recon, mu, logsigma

    return functools.partial(fwd, packed)


def init_params(key, in_channels, latent_size, hidden=HIDDEN):
    """Deterministic init. Weights stored as (in, out) = transpose of torch layout."""
    ks = jax.random.split(key, 16)

    def lin(kw, kb, fan_in, fan_out):
        bound = 1.0 / jnp.sqrt(fan_in)
        w = jax.random.uniform(kw, (fan_in, fan_out), jnp.float32, -bound, bound)
        b = jax.random.uniform(kb, (1, fan_out), jnp.float32, -bound, bound)
        return w, b

    p = {}
    p["we1"], p["be1"] = lin(ks[0], ks[1], in_channels, hidden)
    p["we2"], p["be2"] = lin(ks[2], ks[3], hidden, hidden)
    p["wmu"], p["bmu"] = lin(ks[4], ks[5], hidden, latent_size)
    p["wls"], p["bls"] = lin(ks[6], ks[7], hidden, latent_size)
    p["wd1"], p["bd1"] = lin(ks[8], ks[9], latent_size, hidden)
    p["wd2"], p["bd2"] = lin(ks[10], ks[11], hidden, hidden)
    p["wd3"], p["bd3"] = lin(ks[12], ks[13], hidden, in_channels)
    return p


def vae_reference(x, eps, p):
    """Pure-JAX f32 reference mirroring the PyTorch forward."""
    h = jax.nn.relu(x @ p["we1"] + p["be1"])
    h = jax.nn.relu(h @ p["we2"] + p["be2"])
    mu = h @ p["wmu"] + p["bmu"]
    logsigma = h @ p["wls"] + p["bls"]
    z = eps * jnp.exp(logsigma) + mu
    d = jax.nn.relu(z @ p["wd1"] + p["bd1"])
    d = jax.nn.relu(d @ p["wd2"] + p["bd2"])
    d = jax.nn.relu(d @ p["wd3"] + p["bd3"])
    return jax.nn.sigmoid(d), mu, logsigma


if __name__ == "__main__":
    in_channels = 32
    latent_size = 16
    batch = 8

    key = jax.random.PRNGKey(0)
    k_params, k_x, k_eps = jax.random.split(key, 3)

    params = init_params(k_params, in_channels, latent_size)
    x = jax.random.normal(k_x, (batch, in_channels), dtype=jnp.float32)
    eps = jax.random.normal(k_eps, (batch, latent_size), dtype=jnp.float32)

    vae_forward = build_vae_forward(params, in_channels, latent_size)
    recon, mu, logsigma = vae_forward(x, eps)
    jax.block_until_ready((recon, mu, logsigma))

    recon_ref, mu_ref, logsigma_ref = vae_reference(x, eps, params)
    assert recon.shape == (batch, in_channels)
    assert mu.shape == (batch, latent_size)
    assert logsigma.shape == (batch, latent_size)
    # bf16 MXU operands (f32 accumulation) -> loosened tolerance vs f32 reference.
    assert jnp.allclose(recon, recon_ref, atol=2e-2, rtol=2e-2)
    assert jnp.allclose(mu, mu_ref, atol=2e-2, rtol=2e-2)
    assert jnp.allclose(logsigma, logsigma_ref, atol=2e-2, rtol=2e-2)

    print("KERNEL_OK")
</pallas_src>

<mosaic_0001>
module attributes {stable_mosaic.version = 11 : i64} {
  func.func @vae_kernel(%arg0: i32, %arg1: memref<8x256xf32, #tpu.memory_space<vmem>>, %arg2: memref<1376x256xbf16, #tpu.memory_space<vmem>>, %arg3: memref<8x256xf32, #tpu.memory_space<vmem>>) attributes {dimension_semantics = [#tpu.dimension_semantics<parallel>], iteration_bounds = array<i64: 1>, scalar_prefetch = 0 : i64, scratch_operands = 0 : i64, tpu.core_type = #tpu.core_type<tc>, window_params = [{transform_indices = @transform_0, window_bounds = array<i64: 8, 256>}, {pipeline_mode = #tpu.pipeline_mode<synchronous>, transform_indices = @transform_1, window_bounds = array<i64: 1376, 256>}, {transform_indices = @transform_2, window_bounds = array<i64: 8, 256>}]} {
    %c0 = arith.constant 0 : index
    %c0_0 = arith.constant 0 : index
    %0 = vector.load %arg1[%c0, %c0_0] : memref<8x256xf32, #tpu.memory_space<vmem>>, vector<8x256xf32>
    %1 = vector.extract_strided_slice %0 {offsets = [0, 0], sizes = [8, 128], strides = [1, 1]} : vector<8x256xf32> to vector<8x128xf32>
    %2 = vector.extract_strided_slice %0 {offsets = [0, 128], sizes = [8, 128], strides = [1, 1]} : vector<8x256xf32> to vector<8x128xf32>
    %3 = arith.truncf %1 : vector<8x128xf32> to vector<8x128xbf16>
    %c0_1 = arith.constant 0 : index
    %c0_2 = arith.constant 0 : index
    %4 = vector.load %arg2[%c0_1, %c0_2] : memref<1376x256xbf16, #tpu.memory_space<vmem>>, vector<128x256xbf16>
    %cst = arith.constant dense<0.000000e+00> : vector<8x256xf32>
    %5 = tpu.matmul %3, %4, %cst {dimension_numbers = #tpu.dot_dimension_numbers<[1], [0], [0], [1], [0, 0, 1, 1], [], []>} : vector<8x128xbf16>, vector<128x256xbf16>, vector<8x256xf32> -> vector<8x256xf32>
    %c1280 = arith.constant 1280 : index
    %c0_3 = arith.constant 0 : index
    %6 = vector.load %arg2[%c1280, %c0_3] : memref<1376x256xbf16, #tpu.memory_space<vmem>>, vector<1x256xbf16>
    %7 = arith.extf %6 : vector<1x256xbf16> to vector<1x256xf32>
    %8 = vector.broadcast %7 : vector<1x256xf32> to vector<8x256xf32>
    %9 = arith.addf %5, %8 : vector<8x256xf32>
    %cst_4 = arith.constant 0.000000e+00 : f32
    %10 = vector.broadcast %cst_4 : f32 to vector<8x256xf32>
    %11 = arith.maximumf %9, %10 : vector<8x256xf32>
    %12 = arith.truncf %11 : vector<8x256xf32> to vector<8x256xbf16>
    %c128 = arith.constant 128 : index
    %c0_5 = arith.constant 0 : index
    %13 = vector.load %arg2[%c128, %c0_5] : memref<1376x256xbf16, #tpu.memory_space<vmem>>, vector<256x256xbf16>
    %cst_6 = arith.constant dense<0.000000e+00> : vector<8x256xf32>
    %14 = tpu.matmul %12, %13, %cst_6 {dimension_numbers = #tpu.dot_dimension_numbers<[1], [0], [0], [1], [0, 0, 1, 1], [], []>} : vector<8x256xbf16>, vector<256x256xbf16>, vector<8x256xf32> -> vector<8x256xf32>
    %c1296 = arith.constant 1296 : index
    %c0_7 = arith.constant 0 : index
    %15 = vector.load %arg2[%c1296, %c0_7] : memref<1376x256xbf16, #tpu.memory_space<vmem>>, vector<1x256xbf16>
    %16 = arith.extf %15 : vector<1x256xbf16> to vector<1x256xf32>
    %17 = vector.broadcast %16 : vector<1x256xf32> to vector<8x256xf32>
    %18 = arith.addf %14, %17 : vector<8x256xf32>
    %cst_8 = arith.constant 0.000000e+00 : f32
    %19 = vector.broadcast %cst_8 : f32 to vector<8x256xf32>
    %20 = arith.maximumf %18, %19 : vector<8x256xf32>
    %21 = arith.truncf %20 : vector<8x256xf32> to vector<8x256xbf16>
    %c384 = arith.constant 384 : index
    %c0_9 = arith.constant 0 : index
    %22 = vector.load %arg2[%c384, %c0_9] : memref<1376x256xbf16, #tpu.memory_space<vmem>>, vector<256x128xbf16>
    %cst_10 = arith.constant dense<0.000000e+00> : vector<8x128xf32>
    %23 = tpu.matmul %21, %22, %cst_10 {dimension_numbers = #tpu.dot_dimension_numbers<[1], [0], [0], [1], [0, 0, 1, 1], [], []>} : vector<8x256xbf16>, vector<256x128xbf16>, vector<8x128xf32> -> vector<8x128xf32>
    %c1312 = arith.constant 1312 : index
    %c0_11 = arith.constant 0 : index
    %24 = vector.load %arg2[%c1312, %c0_11] : memref<1376x256xbf16, #tpu.memory_space<vmem>>, vector<1x128xbf16>
    %25 = arith.extf %24 : vector<1x128xbf16> to vector<1x128xf32>
    %26 = vector.broadcast %25 : vector<1x128xf32> to vector<8x128xf32>
    %27 = arith.addf %23, %26 : vector<8x128xf32>
    %28 = math.exp %27 : vector<8x128xf32>
    %29 = arith.mulf %2, %28 : vector<8x128xf32>
    %c112_i32 = arith.constant 112 : i32
    %30 = tpu.dynamic_rotate %29 by %c112_i32 dim 1 : vector<8x128xf32>, i32 -> vector<8x128xf32>
    %31 = arith.addf %30, %27 : vector<8x128xf32>
    %32 = arith.truncf %31 : vector<8x128xf32> to vector<8x128xbf16>
    %c640 = arith.constant 640 : index
    %c0_12 = arith.constant 0 : index
    %33 = vector.load %arg2[%c640, %c0_12] : memref<1376x256xbf16, #tpu.memory_space<vmem>>, vector<128x256xbf16>
    %cst_13 = arith.constant dense<0.000000e+00> : vector<8x256xf32>
    %34 = tpu.matmul %32, %33, %cst_13 {dimension_numbers = #tpu.dot_dimension_numbers<[1], [0], [0], [1], [0, 0, 1, 1], [], []>} : vector<8x128xbf16>, vector<128x256xbf16>, vector<8x256xf32> -> vector<8x256xf32>
    %c1328 = arith.constant 1328 : index
    %c0_14 = arith.constant 0 : index
    %35 = vector.load %arg2[%c1328, %c0_14] : memref<1376x256xbf16, #tpu.memory_space<vmem>>, vector<1x256xbf16>
    %36 = arith.extf %35 : vector<1x256xbf16> to vector<1x256xf32>
    %37 = vector.broadcast %36 : vector<1x256xf32> to vector<8x256xf32>
    %38 = arith.addf %34, %37 : vector<8x256xf32>
    %cst_15 = arith.constant 0.000000e+00 : f32
    %39 = vector.broadcast %cst_15 : f32 to vector<8x256xf32>
    %40 = arith.maximumf %38, %39 : vector<8x256xf32>
    %41 = arith.truncf %40 : vector<8x256xf32> to vector<8x256xbf16>
    %c768 = arith.constant 768 : index
    %c0_16 = arith.constant 0 : index
    %42 = vector.load %arg2[%c768, %c0_16] : memref<1376x256xbf16, #tpu.memory_space<vmem>>, vector<256x256xbf16>
    %cst_17 = arith.constant dense<0.000000e+00> : vector<8x256xf32>
    %43 = tpu.matmul %41, %42, %cst_17 {dimension_numbers = #tpu.dot_dimension_numbers<[1], [0], [0], [1], [0, 0, 1, 1], [], []>} : vector<8x256xbf16>, vector<256x256xbf16>, vector<8x256xf32> -> vector<8x256xf32>
    %c1344 = arith.constant 1344 : index
    %c0_18 = arith.constant 0 : index
    %44 = vector.load %arg2[%c1344, %c0_18] : memref<1376x256xbf16, #tpu.memory_space<vmem>>, vector<1x256xbf16>
    %45 = arith.extf %44 : vector<1x256xbf16> to vector<1x256xf32>
    %46 = vector.broadcast %45 : vector<1x256xf32> to vector<8x256xf32>
    %47 = arith.addf %43, %46 : vector<8x256xf32>
    %cst_19 = arith.constant 0.000000e+00 : f32
    %48 = vector.broadcast %cst_19 : f32 to vector<8x256xf32>
    %49 = arith.maximumf %47, %48 : vector<8x256xf32>
    %50 = arith.truncf %49 : vector<8x256xf32> to vector<8x256xbf16>
    %c1024 = arith.constant 1024 : index
    %c0_20 = arith.constant 0 : index
    %51 = vector.load %arg2[%c1024, %c0_20] : memref<1376x256xbf16, #tpu.memory_space<vmem>>, vector<256x128xbf16>
    %cst_21 = arith.constant dense<0.000000e+00> : vector<8x128xf32>
    %52 = tpu.matmul %50, %51, %cst_21 {dimension_numbers = #tpu.dot_dimension_numbers<[1], [0], [0], [1], [0, 0, 1, 1], [], []>} : vector<8x256xbf16>, vector<256x128xbf16>, vector<8x128xf32> -> vector<8x128xf32>
    %c1360 = arith.constant 1360 : index
    %c0_22 = arith.constant 0 : index
    %53 = vector.load %arg2[%c1360, %c0_22] : memref<1376x256xbf16, #tpu.memory_space<vmem>>, vector<1x128xbf16>
    %54 = arith.extf %53 : vector<1x128xbf16> to vector<1x128xf32>
    %55 = vector.broadcast %54 : vector<1x128xf32> to vector<8x128xf32>
    %56 = arith.addf %52, %55 : vector<8x128xf32>
    %cst_23 = arith.constant 0.000000e+00 : f32
    %57 = vector.broadcast %cst_23 : f32 to vector<8x128xf32>
    %58 = arith.maximumf %56, %57 : vector<8x128xf32>
    %59 = arith.negf %58 : vector<8x128xf32>
    %60 = math.exp %59 : vector<8x128xf32>
    %cst_24 = arith.constant 1.000000e+00 : f32
    %61 = vector.broadcast %cst_24 : f32 to vector<8x128xf32>
    %62 = arith.addf %61, %60 : vector<8x128xf32>
    %63 = arith.divf %61, %62 : vector<8x128xf32>
    %c0_25 = arith.constant 0 : index
    %c0_26 = arith.constant 0 : index
    %64 = vector.load %arg3[%c0_25, %c0_26] : memref<8x256xf32, #tpu.memory_space<vmem>>, vector<8x128xf32>
    tpu.vector_store %arg3[%c0_25, %c0_26], %63 {strides = array<i32>} : memref<8x256xf32, #tpu.memory_space<vmem>>, vector<8x128xf32>,
    %c0_27 = arith.constant 0 : index
    %c128_28 = arith.constant 128 : index
    %65 = vector.load %arg3[%c0_27, %c128_28] : memref<8x256xf32, #tpu.memory_space<vmem>>, vector<8x128xf32>
    tpu.vector_store %arg3[%c0_27, %c128_28], %27 {strides = array<i32>} : memref<8x256xf32, #tpu.memory_space<vmem>>, vector<8x128xf32>,
    return
  }
  func.func @transform_0(%arg0: i32) -> (i32, i32) {
    %c0_i32 = arith.constant 0 : i32
    %c0_i32_0 = arith.constant 0 : i32
    return %arg0, %c0_i32 : i32, i32
  }
  func.func @transform_1(%arg0: i32) -> (i32, i32) {
    %c0_i32 = arith.constant 0 : i32
    %c0_i32_0 = arith.constant 0 : i32
    %c0_i32_1 = arith.constant 0 : i32
    return %c0_i32, %c0_i32_0 : i32, i32
  }
  func.func @transform_2(%arg0: i32) -> (i32, i32) {
    %c0_i32 = arith.constant 0 : i32
    %c0_i32_0 = arith.constant 0 : i32
    return %arg0, %c0_i32 : i32, i32
  }
}

</mosaic_0001>

<llo_original>
// kernel: fwd.1
$region0: #{fwd.1}
  #allocation0 [shape = 'u32[]', space=smem, size = 0x4, offset = 0x4, fixed_abs, tag = 'smem constant byte address 0x4 - core index']
  #allocation1 [shape = 'u32[144,128]{1,0:T(1,128)}', space=vmem, size = 0x12000, scoped, tag = 'internal scratch']
  %s0 = inlined_call_operand.vmem [shape: f32[8,256], index: 0, kind: input, shape index: {}]
  %s1 = inlined_call_operand.hbm [shape: bf16[1376,256], index: 1, kind: input, shape index: {}]
  %s2 = inlined_call_operand.vmem [shape: f32[8,256], index: 2, kind: output, shape index: {}]
  %s3 = sld [smem:[#allocation0]]
  $region22: #{fwd.1} parent=0
    _
  %s5 = ssub.s32 1, %s3
  %s6 = scalar_select 0, %s5, %s3
  $region1: #{fwd.1} parent=0
    #allocation2 [shape = 'u8[704512]{0}', space=vmem, size = 0xac000, scoped, tag = 'input window, operand 1, single buffered']
    #allocation3 [shape = 's32[1]{0}', space=sflag, size = 0x4, scoped, tag = 'scoped memory for fwd.1']
    %7 = vsyncpa [#allocation3], 0
    // Predicated region
    $region2: #{fwd.1} parent=1 // pred_check
      _
    $region3: #{fwd.1} parent=1 // pred_check_branch
      %9 = sbr.rel (0) target = $region5
    $region4: #{fwd.1} parent=1 // pred_region
      _
    $region5: #{fwd.1} parent=1 // pred_fallthru
      _
    // Predicated region
    $region6: #{fwd.1} parent=1 // pred_check
      _
    $region7: #{fwd.1} parent=1 // pred_check_branch
      %11 = sbr.rel (0) target = $region9
    $region8: #{fwd.1} parent=1 // pred_region
      %s13 = ssub.s32 22016, 22016
      %14 = vsyncadd [#allocation3], %s13
      %s15 = sshll.u32 [#allocation2], 4
      %s16 = int_to_ptr.vmem [resolvable:$true] %s15
      %21 = dma.hbm_to_vmem [thread:$0]  %s1, 22016, %s16, [#allocation3], 128, 128, 8
    $region9: #{fwd.1} parent=1 // pred_fallthru
      _
    // Predicated region
    $region10: #{fwd.1} parent=1 // pred_check
      _
    $region11: #{fwd.1} parent=1 // pred_check_branch
      %23 = sbr.rel (0) target = $region13
    $region12: #{fwd.1} parent=1 // pred_region
      %24 = dma.done [#allocation3], 22016
    $region13: #{fwd.1} parent=1 // pred_fallthru
      _
    %v26 = vld [vmem:[%s0] sm:$0xff]
    %v27 = vld [vmem:[%s0 + $0x8] sm:$0xff]
    %v28 = vpack.c.bf16 %v26, %v26
    %v29 = vld [vmem:[#allocation2] sm:$0xff]
    %v30 = vld [vmem:[#allocation2 + $0x8] sm:$0xff]
    %v31 = vld [vmem:[#allocation2 + $0x10] sm:$0xff]
    %v32 = vld [vmem:[#allocation2 + $0x18] sm:$0xff]
    %v33 = vld [vmem:[#allocation2 + $0x20] sm:$0xff]
    %v34 = vld [vmem:[#allocation2 + $0x28] sm:$0xff]
    %v35 = vld [vmem:[#allocation2 + $0x30] sm:$0xff]
    %v36 = vld [vmem:[#allocation2 + $0x38] sm:$0xff]
    %v37 = vld [vmem:[#allocation2 + $0x40] sm:$0xff]
    %v38 = vld [vmem:[#allocation2 + $0x48] sm:$0xff]
    %v39 = vld [vmem:[#allocation2 + $0x50] sm:$0xff]
    %v40 = vld [vmem:[#allocation2 + $0x58] sm:$0xff]
    %v41 = vld [vmem:[#allocation2 + $0x60] sm:$0xff]
    %v42 = vld [vmem:[#allocation2 + $0x68] sm:$0xff]
    %v43 = vld [vmem:[#allocation2 + $0x70] sm:$0xff]
    %v44 = vld [vmem:[#allocation2 + $0x78] sm:$0xff]
    %v45 = vld [vmem:[#allocation2 + $0x500] sm:$0x11]
    %v46 = vunpack.c.l.bf16 %v45
    %v47 = vunpack.c.h.bf16 %v45
    %v48 = vlaneseq
    %v49 = vshrl.u32 %v48, 7
    %v50 = vsub.s32 0, %v49
    %v51 = vrot.slane %v46, %v50
    %v52 = vlaneseq
    %v53 = vshrl.u32 %v52, 7
    %v54 = vsub.s32 0, %v53
    %v55 = vrot.slane %v47, %v54
    %v72 = vunpack.c.l.b16 %v29
    %v73 = vunpack.c.h.b16 %v29
    %v74 = vunpack.c.l.b16 %v30
    %v75 = vunpack.c.h.b16 %v30
    %v76 = vunpack.c.l.b16 %v31
    %v77 = vunpack.c.h.b16 %v31
    %v78 = vunpack.c.l.b16 %v32
    %v79 = vunpack.c.h.b16 %v32
    %v80 = vunpack.c.l.b16 %v33
    %v81 = vunpack.c.h.b16 %v33
    %v82 = vunpack.c.l.b16 %v34
    %v83 = vunpack.c.h.b16 %v34
    %v84 = vunpack.c.l.b16 %v35
    %v85 = vunpack.c.h.b16 %v35
    %v86 = vunpack.c.l.b16 %v36
    %v87 = vunpack.c.h.b16 %v36
    %v88 = vunpack.c.l.b16 %v37
    %v89 = vunpack.c.h.b16 %v37
    %v90 = vunpack.c.l.b16 %v38
    %v91 = vunpack.c.h.b16 %v38
    %v92 = vunpack.c.l.b16 %v39
    %v93 = vunpack.c.h.b16 %v39
    %v94 = vunpack.c.l.b16 %v40
    %v95 = vunpack.c.h.b16 %v40
    %v96 = vunpack.c.l.b16 %v41
    %v97 = vunpack.c.h.b16 %v41
    %v98 = vunpack.c.l.b16 %v42
    %v99 = vunpack.c.h.b16 %v42
    %v100 = vunpack.c.l.b16 %v43
    %v101 = vunpack.c.h.b16 %v43
    %v102 = vunpack.c.l.b16 %v44
    %v103 = vunpack.c.h.b16 %v44
    %v104 = vpack.c.b16 %v74, %v72
    %v105 = vpack.c.b16 %v75, %v73
    %v106 = vpack.c.b16 %v78, %v76
    %v107 = vpack.c.b16 %v79, %v77
    %v108 = vpack.c.b16 %v82, %v80
    %v109 = vpack.c.b16 %v83, %v81
    %v110 = vpack.c.b16 %v86, %v84
    %v111 = vpack.c.b16 %v87, %v85
    %v112 = vpack.c.b16 %v90, %v88
    %v113 = vpack.c.b16 %v91, %v89
    %v114 = vpack.c.b16 %v94, %v92
    %v115 = vpack.c.b16 %v95, %v93
    %v116 = vpack.c.b16 %v98, %v96
    %v117 = vpack.c.b16 %v99, %v97
    %v118 = vpack.c.b16 %v102, %v100
    %v119 = vpack.c.b16 %v103, %v101
    %136 = vmatprep.subr.bf16.mxu0 %v105
    %137 = vmatpush1.bf16.msra.mxu0 %v104
    %138 = vmatprep.subr.bf16.mxu0 %v107
    %139 = vmatpush1.bf16.msra.mxu0 %v106
    %140 = vmatprep.subr.bf16.mxu0 %v109
    %141 = vmatpush1.bf16.msra.mxu0 %v108
    %142 = vmatprep.subr.bf16.mxu0 %v111
    %143 = vmatpush1.bf16.msra.mxu0 %v110
    %144 = vmatprep.subr.bf16.mxu0 %v113
    %145 = vmatpush1.bf16.msra.mxu0 %v112
    %146 = vmatprep.subr.bf16.mxu0 %v115
    %147 = vmatpush1.bf16.msra.mxu0 %v114
    %148 = vmatprep.subr.bf16.mxu0 %v117
    %149 = vmatpush1.bf16.msra.mxu0 %v116
    %150 = vmatprep.subr.bf16.mxu0 %v119
    %151 = vmatpush1.bf16.msra.mxu0 %v118
    %152 = vmatprep.subr.bf16.mxu0 0
    %153 = vmatpush1.bf16.msra.mxu0 0
    %154 = vmatprep.subr.bf16.mxu0 0
    %155 = vmatpush1.bf16.msra.mxu0 0
    %156 = vmatprep.subr.bf16.mxu0 0
    %157 = vmatpush1.bf16.msra.mxu0 0
    %158 = vmatprep.subr.bf16.mxu0 0
    %159 = vmatpush1.bf16.msra.mxu0 0
    %160 = vmatprep.subr.bf16.mxu0 0
    %161 = vmatpush1.bf16.msra.mxu0 0
    %162 = vmatprep.subr.bf16.mxu0 0
    %163 = vmatpush1.bf16.msra.mxu0 0
    %164 = vmatprep.subr.bf16.mxu0 0
    %165 = vmatpush1.bf16.msra.mxu0 0
    %166 = vmatprep.subr.bf16.mxu0 0
    %167 = vmatpush1.bf16.msra.mxu0 0
    %168 = vmatprep.mubr.bf16.mxu0 0
    %169 = vmatmul.mubr.bf16.gmra.mrb[0].mxu0 %v28
    %v170 = vpop.f32.mrb[0].mxu0
    %v171 = vadd.f32 %v51, %v170
    %v172 = vpop.f32.mrb[0].mxu0
    %v173 = vadd.f32 %v55, %v172
    %v174 = vpop.f32.mrb[0].mxu0
    %v175 = vpop.f32.mrb[0].mxu0
    %176 = vdwg.mxu0
    %v177 = vmax.f32 %v171, 0.0
    %v178 = vmax.f32 %v173, 0.0
    %v179 = vpack.c.bf16 %v177, %v177
    %v180 = vpack.c.bf16 %v178, %v178
    %v181 = vld [vmem:[#allocation2 + $0x80] sm:$0xff]
    %v182 = vld [vmem:[#allocation2 + $0x88] sm:$0xff]
    %v183 = vld [vmem:[#allocation2 + $0x90] sm:$0xff]
    %v184 = vld [vmem:[#allocation2 + $0x98] sm:$0xff]
    %v185 = vld [vmem:[#allocation2 + $0xa0] sm:$0xff]
    %v186 = vld [vmem:[#allocation2 + $0xa8] sm:$0xff]
    %v187 = vld [vmem:[#allocation2 + $0xb0] sm:$0xff]
    %v188 = vld [vmem:[#allocation2 + $0xb8] sm:$0xff]
    %v189 = vld [vmem:[#allocation2 + $0xc0] sm:$0xff]
    %v190 = vld [vmem:[#allocation2 + $0xc8] sm:$0xff]
    %v191 = vld [vmem:[#allocation2 + $0xd0] sm:$0xff]
    %v192 = vld [vmem:[#allocation2 + $0xd8] sm:$0xff]
    %v193 = vld [vmem:[#allocation2 + $0xe0] sm:$0xff]
    %v194 = vld [vmem:[#allocation2 + $0xe8] sm:$0xff]
    %v195 = vld [vmem:[#allocation2 + $0xf0] sm:$0xff]
    %v196 = vld [vmem:[#allocation2 + $0xf8] sm:$0xff]
    %v197 = vld [vmem:[#allocation2 + $0x100] sm:$0xff]
    %v198 = vld [vmem:[#allocation2 + $0x108] sm:$0xff]
    %v199 = vld [vmem:[#allocation2 + $0x110] sm:$0xff]
    %v200 = vld [vmem:[#allocation2 + $0x118] sm:$0xff]
    %v201 = vld [vmem:[#allocation2 + $0x120] sm:$0xff]
    %v202 = vld [vmem:[#allocation2 + $0x128] sm:$0xff]
    %v203 = vld [vmem:[#allocation2 + $0x130] sm:$0xff]
    %v204 = vld [vmem:[#allocation2 + $0x138] sm:$0xff]
    %v205 = vld [vmem:[#allocation2 + $0x140] sm:$0xff]
    %v206 = vld [vmem:[#allocation2 + $0x148] sm:$0xff]
    %v207 = vld [vmem:[#allocation2 + $0x150] sm:$0xff]
    %v208 = vld [vmem:[#allocation2 + $0x158] sm:$0xff]
    %v209 = vld [vmem:[#allocation2 + $0x160] sm:$0xff]
    %v210 = vld [vmem:[#allocation2 + $0x168] sm:$0xff]
    %v211 = vld [vmem:[#allocation2 + $0x170] sm:$0xff]
    %v212 = vld [vmem:[#allocation2 + $0x178] sm:$0xff]
    %v213 = vld [vmem:[#allocation2 + $0x510] sm:$0x11]
    %v214 = vunpack.c.l.bf16 %v213
    %v215 = vunpack.c.h.bf16 %v213
    %v216 = vlaneseq
    %v217 = vshrl.u32 %v216, 7
    %v218 = vsub.s32 0, %v217
    %v219 = vrot.slane %v214, %v218
    %v220 = vlaneseq
    %v221 = vshrl.u32 %v220, 7
    %v222 = vsub.s32 0, %v221
    %v223 = vrot.slane %v215, %v222
    %v256 = vunpack.c.l.b16 %v181
    %v257 = vunpack.c.h.b16 %v181
    %v258 = vunpack.c.l.b16 %v182
    %v259 = vunpack.c.h.b16 %v182
    %v260 = vunpack.c.l.b16 %v183
    %v261 = vunpack.c.h.b16 %v183
    %v262 = vunpack.c.l.b16 %v184
    %v263 = vunpack.c.h.b16 %v184
    %v264 = vunpack.c.l.b16 %v185
    %v265 = vunpack.c.h.b16 %v185
    %v266 = vunpack.c.l.b16 %v186
    %v267 = vunpack.c.h.b16 %v186
    %v268 = vunpack.c.l.b16 %v187
    %v269 = vunpack.c.h.b16 %v187
    %v270 = vunpack.c.l.b16 %v188
    %v271 = vunpack.c.h.b16 %v188
    %v272 = vunpack.c.l.b16 %v189
    %v273 = vunpack.c.h.b16 %v189
    %v274 = vunpack.c.l.b16 %v190
    %v275 = vunpack.c.h.b16 %v190
    %v276 = vunpack.c.l.b16 %v191
    %v277 = vunpack.c.h.b16 %v191
    %v278 = vunpack.c.l.b16 %v192
    %v279 = vunpack.c.h.b16 %v192
    %v280 = vunpack.c.l.b16 %v193
    %v281 = vunpack.c.h.b16 %v193
    %v282 = vunpack.c.l.b16 %v194
    %v283 = vunpack.c.h.b16 %v194
    %v284 = vunpack.c.l.b16 %v195
    %v285 = vunpack.c.h.b16 %v195
    %v286 = vunpack.c.l.b16 %v196
    %v287 = vunpack.c.h.b16 %v196
    %v288 = vunpack.c.l.b16 %v197
    %v289 = vunpack.c.h.b16 %v197
    %v290 = vunpack.c.l.b16 %v198
    %v291 = vunpack.c.h.b16 %v198
    %v292 = vunpack.c.l.b16 %v199
    %v293 = vunpack.c.h.b16 %v199
    %v294 = vunpack.c.l.b16 %v200
    %v295 = vunpack.c.h.b16 %v200
    %v296 = vunpack.c.l.b16 %v201
    %v297 = vunpack.c.h.b16 %v201
    %v298 = vunpack.c.l.b16 %v202
    %v299 = vunpack.c.h.b16 %v202
    %v300 = vunpack.c.l.b16 %v203
    %v301 = vunpack.c.h.b16 %v203
    %v302 = vunpack.c.l.b16 %v204
    %v303 = vunpack.c.h.b16 %v204
    %v304 = vunpack.c.l.b16 %v205
    %v305 = vunpack.c.h.b16 %v205
    %v306 = vunpack.c.l.b16 %v206
    %v307 = vunpack.c.h.b16 %v206
    %v308 = vunpack.c.l.b16 %v207
    %v309 = vunpack.c.h.b16 %v207
    %v310 = vunpack.c.l.b16 %v208
    %v311 = vunpack.c.h.b16 %v208
    %v312 = vunpack.c.l.b16 %v209
    %v313 = vunpack.c.h.b16 %v209
    %v314 = vunpack.c.l.b16 %v210
    %v315 = vunpack.c.h.b16 %v210
    %v316 = vunpack.c.l.b16 %v211
    %v317 = vunpack.c.h.b16 %v211
    %v318 = vunpack.c.l.b16 %v212
    %v319 = vunpack.c.h.b16 %v212
    %v320 = vpack.c.b16 %v258, %v256
    %v321 = vpack.c.b16 %v259, %v257
    %v322 = vpack.c.b16 %v262, %v260
    %v323 = vpack.c.b16 %v263, %v261
    %v324 = vpack.c.b16 %v266, %v264
    %v325 = vpack.c.b16 %v267, %v265
    %v326 = vpack.c.b16 %v270, %v268
    %v327 = vpack.c.b16 %v271, %v269
    %v328 = vpack.c.b16 %v274, %v272
    %v329 = vpack.c.b16 %v275, %v273
    %v330 = vpack.c.b16 %v278, %v276
    %v331 = vpack.c.b16 %v279, %v277
    %v332 = vpack.c.b16 %v282, %v280
    %v333 = vpack.c.b16 %v283, %v281
    %v334 = vpack.c.b16 %v286, %v284
    %v335 = vpack.c.b16 %v287, %v285
    %v336 = vpack.c.b16 %v290, %v288
    %v337 = vpack.c.b16 %v291, %v289
    %v338 = vpack.c.b16 %v294, %v292
    %v339 = vpack.c.b16 %v295, %v293
    %v340 = vpack.c.b16 %v298, %v296
    %v341 = vpack.c.b16 %v299, %v297
    %v342 = vpack.c.b16 %v302, %v300
    %v343 = vpack.c.b16 %v303, %v301
    %v344 = vpack.c.b16 %v306, %v304
    %v345 = vpack.c.b16 %v307, %v305
    %v346 = vpack.c.b16 %v310, %v308
    %v347 = vpack.c.b16 %v311, %v309
    %v348 = vpack.c.b16 %v314, %v312
    %v349 = vpack.c.b16 %v315, %v313
    %v350 = vpack.c.b16 %v318, %v316
    %v351 = vpack.c.b16 %v319, %v317
    %384 = vmatprep.subr.bf16.mxu0 %v321
    %385 = vmatpush1.bf16.msra.mxu0 %v320
    %386 = vmatprep.subr.bf16.mxu0 %v323
    %387 = vmatpush1.bf16.msra.mxu0 %v322
    %388 = vmatprep.subr.bf16.mxu0 %v325
    %389 = vmatpush1.bf16.msra.mxu0 %v324
    %390 = vmatprep.subr.bf16.mxu0 %v327
    %391 = vmatpush1.bf16.msra.mxu0 %v326
    %392 = vmatprep.subr.bf16.mxu0 %v329
    %393 = vmatpush1.bf16.msra.mxu0 %v328
    %394 = vmatprep.subr.bf16.mxu0 %v331
    %395 = vmatpush1.bf16.msra.mxu0 %v330
    %396 = vmatprep.subr.bf16.mxu0 %v333
    %397 = vmatpush1.bf16.msra.mxu0 %v332
    %398 = vmatprep.subr.bf16.mxu0 %v335
    %399 = vmatpush1.bf16.msra.mxu0 %v334
    %400 = vmatprep.subr.bf16.mxu0 %v337
    %401 = vmatpush1.bf16.msra.mxu0 %v336
    %402 = vmatprep.subr.bf16.mxu0 %v339
    %403 = vmatpush1.bf16.msra.mxu0 %v338
    %404 = vmatprep.subr.bf16.mxu0 %v341
    %405 = vmatpush1.bf16.msra.mxu0 %v340
    %406 = vmatprep.subr.bf16.mxu0 %v343
    %407 = vmatpush1.bf16.msra.mxu0 %v342
    %408 = vmatprep.subr.bf16.mxu0 %v345
    %409 = vmatpush1.bf16.msra.mxu0 %v344
    %410 = vmatprep.subr.bf16.mxu0 %v347
    %411 = vmatpush1.bf16.msra.mxu0 %v346
    %412 = vmatprep.subr.bf16.mxu0 %v349
    %413 = vmatpush1.bf16.msra.mxu0 %v348
    %414 = vmatprep.subr.bf16.mxu0 %v351
    %415 = vmatpush1.bf16.msra.mxu0 %v350
    %416 = vmatprep.mubr.bf16.mxu0 %v180
    %417 = vmatmul.mubr.bf16.gmra.mrb[0].mxu0 %v179
    %v418 = vpop.f32.mrb[0].mxu0
    %v419 = vadd.f32 %v219, %v418
    %v420 = vpop.f32.mrb[0].mxu0
    %v421 = vadd.f32 %v223, %v420
    %v422 = vpop.f32.mrb[0].mxu0
    %v423 = vpop.f32.mrb[0].mxu0
    %424 = vdwg.mxu0
    %v425 = vmax.f32 %v419, 0.0
    %v426 = vmax.f32 %v421, 0.0
    %v427 = vpack.c.bf16 %v425, %v425
    %v428 = vpack.c.bf16 %v426, %v426
    %v429 = vld [vmem:[#allocation2 + $0x180] sm:$0xf]
    %v430 = vld [vmem:[#allocation2 + $0x188] sm:$0xf]
    %v431 = vld [vmem:[#allocation2 + $0x190] sm:$0xf]
    %v432 = vld [vmem:[#allocation2 + $0x198] sm:$0xf]
    %v433 = vld [vmem:[#allocation2 + $0x1a0] sm:$0xf]
    %v434 = vld [vmem:[#allocation2 + $0x1a8] sm:$0xf]
    %v435 = vld [vmem:[#allocation2 + $0x1b0] sm:$0xf]
    %v436 = vld [vmem:[#allocation2 + $0x1b8] sm:$0xf]
    %v437 = vld [vmem:[#allocation2 + $0x1c0] sm:$0xf]
    %v438 = vld [vmem:[#allocation2 + $0x1c8] sm:$0xf]
    %v439 = vld [vmem:[#allocation2 + $0x1d0] sm:$0xf]
    %v440 = vld [vmem:[#allocation2 + $0x1d8] sm:$0xf]
    %v441 = vld [vmem:[#allocation2 + $0x1e0] sm:$0xf]
    %v442 = vld [vmem:[#allocation2 + $0x1e8] sm:$0xf]
    %v443 = vld [vmem:[#allocation2 + $0x1f0] sm:$0xf]
    %v444 = vld [vmem:[#allocation2 + $0x1f8] sm:$0xf]
    %v445 = vld [vmem:[#allocation2 + $0x200] sm:$0xf]
    %v446 = vld [vmem:[#allocation2 + $0x208] sm:$0xf]
    %v447 = vld [vmem:[#allocation2 + $0x210] sm:$0xf]
    %v448 = vld [vmem:[#allocation2 + $0x218] sm:$0xf]
    %v449 = vld [vmem:[#allocation2 + $0x220] sm:$0xf]
    %v450 = vld [vmem:[#allocation2 + $0x228] sm:$0xf]
    %v451 = vld [vmem:[#allocation2 + $0x230] sm:$0xf]
    %v452 = vld [vmem:[#allocation2 + $0x238] sm:$0xf]
    %v453 = vld [vmem:[#allocation2 + $0x240] sm:$0xf]
    %v454 = vld [vmem:[#allocation2 + $0x248] sm:$0xf]
    %v455 = vld [vmem:[#allocation2 + $0x250] sm:$0xf]
    %v456 = vld [vmem:[#allocation2 + $0x258] sm:$0xf]
    %v457 = vld [vmem:[#allocation2 + $0x260] sm:$0xf]
    %v458 = vld [vmem:[#allocation2 + $0x268] sm:$0xf]
    %v459 = vld [vmem:[#allocation2 + $0x270] sm:$0xf]
    %v460 = vld [vmem:[#allocation2 + $0x278] sm:$0xf]
    %v461 = vld [vmem:[#allocation2 + $0x520] sm:$0x1]
    %v462 = vunpack.c.l.bf16 %v461
    %v463 = vlaneseq
    %v464 = vshrl.u32 %v463, 7
    %v465 = vsub.s32 0, %v464
    %v466 = vrot.slane %v462, %v465
    %v499 = vunpack.c.l.b16 %v429
    %v500 = vunpack.c.l.b16 %v430
    %v501 = vunpack.c.l.b16 %v431
    %v502 = vunpack.c.l.b16 %v432
    %v503 = vunpack.c.l.b16 %v433
    %v504 = vunpack.c.l.b16 %v434
    %v505 = vunpack.c.l.b16 %v435
    %v506 = vunpack.c.l.b16 %v436
    %v507 = vunpack.c.l.b16 %v437
    %v508 = vunpack.c.l.b16 %v438
    %v509 = vunpack.c.l.b16 %v439
    %v510 = vunpack.c.l.b16 %v440
    %v511 = vunpack.c.l.b16 %v441
    %v512 = vunpack.c.l.b16 %v442
    %v513 = vunpack.c.l.b16 %v443
    %v514 = vunpack.c.l.b16 %v444
    %v515 = vunpack.c.l.b16 %v445
    %v516 = vunpack.c.l.b16 %v446
    %v517 = vunpack.c.l.b16 %v447
    %v518 = vunpack.c.l.b16 %v448
    %v519 = vunpack.c.l.b16 %v449
    %v520 = vunpack.c.l.b16 %v450
    %v521 = vunpack.c.l.b16 %v451
    %v522 = vunpack.c.l.b16 %v452
    %v523 = vunpack.c.l.b16 %v453
    %v524 = vunpack.c.l.b16 %v454
    %v525 = vunpack.c.l.b16 %v455
    %v526 = vunpack.c.l.b16 %v456
    %v527 = vunpack.c.l.b16 %v457
    %v528 = vunpack.c.l.b16 %v458
    %v529 = vunpack.c.l.b16 %v459
    %v530 = vunpack.c.l.b16 %v460
    %v531 = vpack.c.b16 %v500, %v499
    %v532 = vpack.c.b16 %v502, %v501
    %v533 = vpack.c.b16 %v504, %v503
    %v534 = vpack.c.b16 %v506, %v505
    %v535 = vpack.c.b16 %v508, %v507
    %v536 = vpack.c.b16 %v510, %v509
    %v537 = vpack.c.b16 %v512, %v511
    %v538 = vpack.c.b16 %v514, %v513
    %v539 = vpack.c.b16 %v516, %v515
    %v540 = vpack.c.b16 %v518, %v517
    %v541 = vpack.c.b16 %v520, %v519
    %v542 = vpack.c.b16 %v522, %v521
    %v543 = vpack.c.b16 %v524, %v523
    %v544 = vpack.c.b16 %v526, %v525
    %v545 = vpack.c.b16 %v528, %v527
    %v546 = vpack.c.b16 %v530, %v529
    %563 = vmatprep.subr.bf16.mxu0 0
    %564 = vmatpush1.bf16.msra.mxu0 %v531
    %565 = vmatprep.subr.bf16.mxu0 0
    %566 = vmatpush1.bf16.msra.mxu0 %v532
    %567 = vmatprep.subr.bf16.mxu0 0
    %568 = vmatpush1.bf16.msra.mxu0 %v533
    %569 = vmatprep.subr.bf16.mxu0 0
    %570 = vmatpush1.bf16.msra.mxu0 %v534
    %571 = vmatprep.subr.bf16.mxu0 0
    %572 = vmatpush1.bf16.msra.mxu0 %v535
    %573 = vmatprep.subr.bf16.mxu0 0
    %574 = vmatpush1.bf16.msra.mxu0 %v536
    %575 = vmatprep.subr.bf16.mxu0 0
    %576 = vmatpush1.bf16.msra.mxu0 %v537
    %577 = vmatprep.subr.bf16.mxu0 0
    %578 = vmatpush1.bf16.msra.mxu0 %v538
    %579 = vmatprep.subr.bf16.mxu0 0
    %580 = vmatpush1.bf16.msra.mxu0 %v539
    %581 = vmatprep.subr.bf16.mxu0 0
    %582 = vmatpush1.bf16.msra.mxu0 %v540
    %583 = vmatprep.subr.bf16.mxu0 0
    %584 = vmatpush1.bf16.msra.mxu0 %v541
    %585 = vmatprep.subr.bf16.mxu0 0
    %586 = vmatpush1.bf16.msra.mxu0 %v542
    %587 = vmatprep.subr.bf16.mxu0 0
    %588 = vmatpush1.bf16.msra.mxu0 %v543
    %589 = vmatprep.subr.bf16.mxu0 0
    %590 = vmatpush1.bf16.msra.mxu0 %v544
    %591 = vmatprep.subr.bf16.mxu0 0
    %592 = vmatpush1.bf16.msra.mxu0 %v545
    %593 = vmatprep.subr.bf16.mxu0 0
    %594 = vmatpush1.bf16.msra.mxu0 %v546
    %595 = vmatprep.mubr.bf16.mxu0 %v428
    %596 = vmatmul.mubr.bf16.gmra.mrb[0].mxu0 %v427
    %v597 = vpop.f32.mrb[0].mxu0
    %v598 = vadd.f32 %v466, %v597
    %v599 = vpop.f32.mrb[0].mxu0
    %v600 = vpop.f32.mrb[0].mxu0
    %v601 = vpop.f32.mrb[0].mxu0
    %602 = vdwg.mxu0
    %v603 = vmul.f32 %v598, 1.442695
    %v604 = vpow.pop %v603
    %v605 = vmul.f32 %v27, %v604
    %606 = vrot.lane.b32.xlu0 %v605, 112
    %v607 = vpop.permute.xlu0 %606
    %v608 = vadd.f32 %v607, %v598
    %v609 = vpack.c.bf16 %v608, %v608
    %v610 = vld [vmem:[#allocation2 + $0x280] sm:$0xff]
    %v611 = vld [vmem:[#allocation2 + $0x288] sm:$0xff]
    %v612 = vld [vmem:[#allocation2 + $0x290] sm:$0xff]
    %v613 = vld [vmem:[#allocation2 + $0x298] sm:$0xff]
    %v614 = vld [vmem:[#allocation2 + $0x2a0] sm:$0xff]
    %v615 = vld [vmem:[#allocation2 + $0x2a8] sm:$0xff]
    %v616 = vld [vmem:[#allocation2 + $0x2b0] sm:$0xff]
    %v617 = vld [vmem:[#allocation2 + $0x2b8] sm:$0xff]
    %v618 = vld [vmem:[#allocation2 + $0x2c0] sm:$0xff]
    %v619 = vld [vmem:[#allocation2 + $0x2c8] sm:$0xff]
    %v620 = vld [vmem:[#allocation2 + $0x2d0] sm:$0xff]
    %v621 = vld [vmem:[#allocation2 + $0x2d8] sm:$0xff]
    %v622 = vld [vmem:[#allocation2 + $0x2e0] sm:$0xff]
    %v623 = vld [vmem:[#allocation2 + $0x2e8] sm:$0xff]
    %v624 = vld [vmem:[#allocation2 + $0x2f0] sm:$0xff]
    %v625 = vld [vmem:[#allocation2 + $0x2f8] sm:$0xff]
    %v626 = vld [vmem:[#allocation2 + $0x530] sm:$0x11]
    %v627 = vunpack.c.l.bf16 %v626
    %v628 = vunpack.c.h.bf16 %v626
    %v629 = vlaneseq
    %v630 = vshrl.u32 %v629, 7
    %v631 = vsub.s32 0, %v630
    %v632 = vrot.slane %v627, %v631
    %v633 = vlaneseq
    %v634 = vshrl.u32 %v633, 7
    %v635 = vsub.s32 0, %v634
    %v636 = vrot.slane %v628, %v635
    %v653 = vunpack.c.l.b16 %v610
    %v654 = vunpack.c.h.b16 %v610
    %v655 = vunpack.c.l.b16 %v611
    %v656 = vunpack.c.h.b16 %v611
    %v657 = vunpack.c.l.b16 %v612
    %v658 = vunpack.c.h.b16 %v612
    %v659 = vunpack.c.l.b16 %v613
    %v660 = vunpack.c.h.b16 %v613
    %v661 = vunpack.c.l.b16 %v614
    %v662 = vunpack.c.h.b16 %v614
    %v663 = vunpack.c.l.b16 %v615
    %v664 = vunpack.c.h.b16 %v615
    %v665 = vunpack.c.l.b16 %v616
    %v666 = vunpack.c.h.b16 %v616
    %v667 = vunpack.c.l.b16 %v617
    %v668 = vunpack.c.h.b16 %v617
    %v669 = vunpack.c.l.b16 %v618
    %v670 = vunpack.c.h.b16 %v618
    %v671 = vunpack.c.l.b16 %v619
    %v672 = vunpack.c.h.b16 %v619
    %v673 = vunpack.c.l.b16 %v620
    %v674 = vunpack.c.h.b16 %v620
    %v675 = vunpack.c.l.b16 %v621
    %v676 = vunpack.c.h.b16 %v621
    %v677 = vunpack.c.l.b16 %v622
    %v678 = vunpack.c.h.b16 %v622
    %v679 = vunpack.c.l.b16 %v623
    %v680 = vunpack.c.h.b16 %v623
    %v681 = vunpack.c.l.b16 %v624
    %v682 = vunpack.c.h.b16 %v624
    %v683 = vunpack.c.l.b16 %v625
    %v684 = vunpack.c.h.b16 %v625
    %v685 = vpack.c.b16 %v655, %v653
    %v686 = vpack.c.b16 %v656, %v654
    %v687 = vpack.c.b16 %v659, %v657
    %v688 = vpack.c.b16 %v660, %v658
    %v689 = vpack.c.b16 %v663, %v661
    %v690 = vpack.c.b16 %v664, %v662
    %v691 = vpack.c.b16 %v667, %v665
    %v692 = vpack.c.b16 %v668, %v666
    %v693 = vpack.c.b16 %v671, %v669
    %v694 = vpack.c.b16 %v672, %v670
    %v695 = vpack.c.b16 %v675, %v673
    %v696 = vpack.c.b16 %v676, %v674
    %v697 = vpack.c.b16 %v679, %v677
    %v698 = vpack.c.b16 %v680, %v678
    %v699 = vpack.c.b16 %v683, %v681
    %v700 = vpack.c.b16 %v684, %v682
    %717 = vmatprep.subr.bf16.mxu0 %v686
    %718 = vmatpush1.bf16.msra.mxu0 %v685
    %719 = vmatprep.subr.bf16.mxu0 %v688
    %720 = vmatpush1.bf16.msra.mxu0 %v687
    %721 = vmatprep.subr.bf16.mxu0 %v690
    %722 = vmatpush1.bf16.msra.mxu0 %v689
    %723 = vmatprep.subr.bf16.mxu0 %v692
    %724 = vmatpush1.bf16.msra.mxu0 %v691
    %725 = vmatprep.subr.bf16.mxu0 %v694
    %726 = vmatpush1.bf16.msra.mxu0 %v693
    %727 = vmatprep.subr.bf16.mxu0 %v696
    %728 = vmatpush1.bf16.msra.mxu0 %v695
    %729 = vmatprep.subr.bf16.mxu0 %v698
    %730 = vmatpush1.bf16.msra.mxu0 %v697
    %731 = vmatprep.subr.bf16.mxu0 %v700
    %732 = vmatpush1.bf16.msra.mxu0 %v699
    %733 = vmatprep.subr.bf16.mxu0 0
    %734 = vmatpush1.bf16.msra.mxu0 0
    %735 = vmatprep.subr.bf16.mxu0 0
    %736 = vmatpush1.bf16.msra.mxu0 0
    %737 = vmatprep.subr.bf16.mxu0 0
    %738 = vmatpush1.bf16.msra.mxu0 0
    %739 = vmatprep.subr.bf16.mxu0 0
    %740 = vmatpush1.bf16.msra.mxu0 0
    %741 = vmatprep.subr.bf16.mxu0 0
    %742 = vmatpush1.bf16.msra.mxu0 0
    %743 = vmatprep.subr.bf16.mxu0 0
    %744 = vmatpush1.bf16.msra.mxu0 0
    %745 = vmatprep.subr.bf16.mxu0 0
    %746 = vmatpush1.bf16.msra.mxu0 0
    %747 = vmatprep.subr.bf16.mxu0 0
    %748 = vmatpush1.bf16.msra.mxu0 0
    %749 = vmatprep.mubr.bf16.mxu0 0
    %750 = vmatmul.mubr.bf16.gmra.mrb[0].mxu0 %v609
    %v751 = vpop.f32.mrb[0].mxu0
    %v752 = vadd.f32 %v632, %v751
    %v753 = vpop.f32.mrb[0].mxu0
    %v754 = vadd.f32 %v636, %v753
    %v755 = vpop.f32.mrb[0].mxu0
    %v756 = vpop.f32.mrb[0].mxu0
    %757 = vdwg.mxu0
    %v758 = vmax.f32 %v752, 0.0
    %v759 = vmax.f32 %v754, 0.0
    %v760 = vpack.c.bf16 %v758, %v758
    %v761 = vpack.c.bf16 %v759, %v759
    %v762 = vld [vmem:[#allocation2 + $0x300] sm:$0xff]
    %v763 = vld [vmem:[#allocation2 + $0x308] sm:$0xff]
    %v764 = vld [vmem:[#allocation2 + $0x310] sm:$0xff]
    %v765 = vld [vmem:[#allocation2 + $0x318] sm:$0xff]
    %v766 = vld [vmem:[#allocation2 + $0x320] sm:$0xff]
    %v767 = vld [vmem:[#allocation2 + $0x328] sm:$0xff]
    %v768 = vld [vmem:[#allocation2 + $0x330] sm:$0xff]
    %v769 = vld [vmem:[#allocation2 + $0x338] sm:$0xff]
    %v770 = vld [vmem:[#allocation2 + $0x340] sm:$0xff]
    %v771 = vld [vmem:[#allocation2 + $0x348] sm:$0xff]
    %v772 = vld [vmem:[#allocation2 + $0x350] sm:$0xff]
    %v773 = vld [vmem:[#allocation2 + $0x358] sm:$0xff]
    %v774 = vld [vmem:[#allocation2 + $0x360] sm:$0xff]
    %v775 = vld [vmem:[#allocation2 + $0x368] sm:$0xff]
    %v776 = vld [vmem:[#allocation2 + $0x370] sm:$0xff]
    %v777 = vld [vmem:[#allocation2 + $0x378] sm:$0xff]
    %v778 = vld [vmem:[#allocation2 + $0x380] sm:$0xff]
    %v779 = vld [vmem:[#allocation2 + $0x388] sm:$0xff]
    %v780 = vld [vmem:[#allocation2 + $0x390] sm:$0xff]
    %v781 = vld [vmem:[#allocation2 + $0x398] sm:$0xff]
    %v782 = vld [vmem:[#allocation2 + $0x3a0] sm:$0xff]
    %v783 = vld [vmem:[#allocation2 + $0x3a8] sm:$0xff]
    %v784 = vld [vmem:[#allocation2 + $0x3b0] sm:$0xff]
    %v785 = vld [vmem:[#allocation2 + $0x3b8] sm:$0xff]
    %v786 = vld [vmem:[#allocation2 + $0x3c0] sm:$0xff]
    %v787 = vld [vmem:[#allocation2 + $0x3c8] sm:$0xff]
    %v788 = vld [vmem:[#allocation2 + $0x3d0] sm:$0xff]
    %v789 = vld [vmem:[#allocation2 + $0x3d8] sm:$0xff]
    %v790 = vld [vmem:[#allocation2 + $0x3e0] sm:$0xff]
    %v791 = vld [vmem:[#allocation2 + $0x3e8] sm:$0xff]
    %v792 = vld [vmem:[#allocation2 + $0x3f0] sm:$0xff]
    %v793 = vld [vmem:[#allocation2 + $0x3f8] sm:$0xff]
    %v794 = vld [vmem:[#allocation2 + $0x540] sm:$0x11]
    %v795 = vunpack.c.l.bf16 %v794
    %v796 = vunpack.c.h.bf16 %v794
    %v797 = vlaneseq
    %v798 = vshrl.u32 %v797, 7
    %v799 = vsub.s32 0, %v798
    %v800 = vrot.slane %v795, %v799
    %v801 = vlaneseq
    %v802 = vshrl.u32 %v801, 7
    %v803 = vsub.s32 0, %v802
    %v804 = vrot.slane %v796, %v803
    %v837 = vunpack.c.l.b16 %v762
    %v838 = vunpack.c.h.b16 %v762
    %v839 = vunpack.c.l.b16 %v763
    %v840 = vunpack.c.h.b16 %v763
    %v841 = vunpack.c.l.b16 %v764
    %v842 = vunpack.c.h.b16 %v764
    %v843 = vunpack.c.l.b16 %v765
    %v844 = vunpack.c.h.b16 %v765
    %v845 = vunpack.c.l.b16 %v766
    %v846 = vunpack.c.h.b16 %v766
    %v847 = vunpack.c.l.b16 %v767
    %v848 = vunpack.c.h.b16 %v767
    %v849 = vunpack.c.l.b16 %v768
    %v850 = vunpack.c.h.b16 %v768
    %v851 = vunpack.c.l.b16 %v769
    %v852 = vunpack.c.h.b16 %v769
    %v853 = vunpack.c.l.b16 %v770
    %v854 = vunpack.c.h.b16 %v770
    %v855 = vunpack.c.l.b16 %v771
    %v856 = vunpack.c.h.b16 %v771
    %v857 = vunpack.c.l.b16 %v772
    %v858 = vunpack.c.h.b16 %v772
    %v859 = vunpack.c.l.b16 %v773
    %v860 = vunpack.c.h.b16 %v773
    %v861 = vunpack.c.l.b16 %v774
    %v862 = vunpack.c.h.b16 %v774
    %v863 = vunpack.c.l.b16 %v775
    %v864 = vunpack.c.h.b16 %v775
    %v865 = vunpack.c.l.b16 %v776
    %v866 = vunpack.c.h.b16 %v776
    %v867 = vunpack.c.l.b16 %v777
    %v868 = vunpack.c.h.b16 %v777
    %v869 = vunpack.c.l.b16 %v778
    %v870 = vunpack.c.h.b16 %v778
    %v871 = vunpack.c.l.b16 %v779
    %v872 = vunpack.c.h.b16 %v779
    %v873 = vunpack.c.l.b16 %v780
    %v874 = vunpack.c.h.b16 %v780
    %v875 = vunpack.c.l.b16 %v781
    %v876 = vunpack.c.h.b16 %v781
    %v877 = vunpack.c.l.b16 %v782
    %v878 = vunpack.c.h.b16 %v782
    %v879 = vunpack.c.l.b16 %v783
    %v880 = vunpack.c.h.b16 %v783
    %v881 = vunpack.c.l.b16 %v784
    %v882 = vunpack.c.h.b16 %v784
    %v883 = vunpack.c.l.b16 %v785
    %v884 = vunpack.c.h.b16 %v785
    %v885 = vunpack.c.l.b16 %v786
    %v886 = vunpack.c.h.b16 %v786
    %v887 = vunpack.c.l.b16 %v787
    %v888 = vunpack.c.h.b16 %v787
    %v889 = vunpack.c.l.b16 %v788
    %v890 = vunpack.c.h.b16 %v788
    %v891 = vunpack.c.l.b16 %v789
    %v892 = vunpack.c.h.b16 %v789
    %v893 = vunpack.c.l.b16 %v790
    %v894 = vunpack.c.h.b16 %v790
    %v895 = vunpack.c.l.b16 %v791
    %v896 = vunpack.c.h.b16 %v791
    %v897 = vunpack.c.l.b16 %v792
    %v898 = vunpack.c.h.b16 %v792
    %v899 = vunpack.c.l.b16 %v793
    %v900 = vunpack.c.h.b16 %v793
    %v901 = vpack.c.b16 %v839, %v837
    %v902 = vpack.c.b16 %v840, %v838
    %v903 = vpack.c.b16 %v843, %v841
    %v904 = vpack.c.b16 %v844, %v842
    %v905 = vpack.c.b16 %v847, %v845
    %v906 = vpack.c.b16 %v848, %v846
    %v907 = vpack.c.b16 %v851, %v849
    %v908 = vpack.c.b16 %v852, %v850
    %v909 = vpack.c.b16 %v855, %v853
    %v910 = vpack.c.b16 %v856, %v854
    %v911 = vpack.c.b16 %v859, %v857
    %v912 = vpack.c.b16 %v860, %v858
    %v913 = vpack.c.b16 %v863, %v861
    %v914 = vpack.c.b16 %v864, %v862
    %v915 = vpack.c.b16 %v867, %v865
    %v916 = vpack.c.b16 %v868, %v866
    %v917 = vpack.c.b16 %v871, %v869
    %v918 = vpack.c.b16 %v872, %v870
    %v919 = vpack.c.b16 %v875, %v873
    %v920 = vpack.c.b16 %v876, %v874
    %v921 = vpack.c.b16 %v879, %v877
    %v922 = vpack.c.b16 %v880, %v878
    %v923 = vpack.c.b16 %v883, %v881
    %v924 = vpack.c.b16 %v884, %v882
    %v925 = vpack.c.b16 %v887, %v885
    %v926 = vpack.c.b16 %v888, %v886
    %v927 = vpack.c.b16 %v891, %v889
    %v928 = vpack.c.b16 %v892, %v890
    %v929 = vpack.c.b16 %v895, %v893
    %v930 = vpack.c.b16 %v896, %v894
    %v931 = vpack.c.b16 %v899, %v897
    %v932 = vpack.c.b16 %v900, %v898
    %965 = vmatprep.subr.bf16.mxu0 %v902
    %966 = vmatpush1.bf16.msra.mxu0 %v901
    %967 = vmatprep.subr.bf16.mxu0 %v904
    %968 = vmatpush1.bf16.msra.mxu0 %v903
    %969 = vmatprep.subr.bf16.mxu0 %v906
    %970 = vmatpush1.bf16.msra.mxu0 %v905
    %971 = vmatprep.subr.bf16.mxu0 %v908
    %972 = vmatpush1.bf16.msra.mxu0 %v907
    %973 = vmatprep.subr.bf16.mxu0 %v910
    %974 = vmatpush1.bf16.msra.mxu0 %v909
    %975 = vmatprep.subr.bf16.mxu0 %v912
    %976 = vmatpush1.bf16.msra.mxu0 %v911
    %977 = vmatprep.subr.bf16.mxu0 %v914
    %978 = vmatpush1.bf16.msra.mxu0 %v913
    %979 = vmatprep.subr.bf16.mxu0 %v916
    %980 = vmatpush1.bf16.msra.mxu0 %v915
    %981 = vmatprep.subr.bf16.mxu0 %v918
    %982 = vmatpush1.bf16.msra.mxu0 %v917
    %983 = vmatprep.subr.bf16.mxu0 %v920
    %984 = vmatpush1.bf16.msra.mxu0 %v919
    %985 = vmatprep.subr.bf16.mxu0 %v922
    %986 = vmatpush1.bf16.msra.mxu0 %v921
    %987 = vmatprep.subr.bf16.mxu0 %v924
    %988 = vmatpush1.bf16.msra.mxu0 %v923
    %989 = vmatprep.subr.bf16.mxu0 %v926
    %990 = vmatpush1.bf16.msra.mxu0 %v925
    %991 = vmatprep.subr.bf16.mxu0 %v928
    %992 = vmatpush1.bf16.msra.mxu0 %v927
    %993 = vmatprep.subr.bf16.mxu0 %v930
    %994 = vmatpush1.bf16.msra.mxu0 %v929
    %995 = vmatprep.subr.bf16.mxu0 %v932
    %996 = vmatpush1.bf16.msra.mxu0 %v931
    %997 = vmatprep.mubr.bf16.mxu0 %v761
    %998 = vmatmul.mubr.bf16.gmra.mrb[0].mxu0 %v760
    %v999 = vpop.f32.mrb[0].mxu0
    %v1000 = vadd.f32 %v800, %v999
    %v1001 = vpop.f32.mrb[0].mxu0
    %v1002 = vadd.f32 %v804, %v1001
    %v1003 = vpop.f32.mrb[0].mxu0
    %v1004 = vpop.f32.mrb[0].mxu0
    %1005 = vdwg.mxu0
    %v1006 = vmax.f32 %v1000, 0.0
    %v1007 = vmax.f32 %v1002, 0.0
    %v1008 = vpack.c.bf16 %v1006, %v1006
    %v1009 = vpack.c.bf16 %v1007, %v1007
    %v1010 = vld [vmem:[#allocation2 + $0x400] sm:$0xf]
    %v1011 = vld [vmem:[#allocation2 + $0x408] sm:$0xf]
    %v1012 = vld [vmem:[#allocation2 + $0x410] sm:$0xf]
    %v1013 = vld [vmem:[#allocation2 + $0x418] sm:$0xf]
    %v1014 = vld [vmem:[#allocation2 + $0x420] sm:$0xf]
    %v1015 = vld [vmem:[#allocation2 + $0x428] sm:$0xf]
    %v1016 = vld [vmem:[#allocation2 + $0x430] sm:$0xf]
    %v1017 = vld [vmem:[#allocation2 + $0x438] sm:$0xf]
    %v1018 = vld [vmem:[#allocation2 + $0x440] sm:$0xf]
    %v1019 = vld [vmem:[#allocation2 + $0x448] sm:$0xf]
    %v1020 = vld [vmem:[#allocation2 + $0x450] sm:$0xf]
    %v1021 = vld [vmem:[#allocation2 + $0x458] sm:$0xf]
    %v1022 = vld [vmem:[#allocation2 + $0x460] sm:$0xf]
    %v1023 = vld [vmem:[#allocation2 + $0x468] sm:$0xf]
    %v1024 = vld [vmem:[#allocation2 + $0x470] sm:$0xf]
    %v1025 = vld [vmem:[#allocation2 + $0x478] sm:$0xf]
    %v1026 = vld [vmem:[#allocation2 + $0x480] sm:$0xf]
    %v1027 = vld [vmem:[#allocation2 + $0x488] sm:$0xf]
    %v1028 = vld [vmem:[#allocation2 + $0x490] sm:$0xf]
    %v1029 = vld [vmem:[#allocation2 + $0x498] sm:$0xf]
    %v1030 = vld [vmem:[#allocation2 + $0x4a0] sm:$0xf]
    %v1031 = vld [vmem:[#allocation2 + $0x4a8] sm:$0xf]
    %v1032 = vld [vmem:[#allocation2 + $0x4b0] sm:$0xf]
    %v1033 = vld [vmem:[#allocation2 + $0x4b8] sm:$0xf]
    %v1034 = vld [vmem:[#allocation2 + $0x4c0] sm:$0xf]
    %v1035 = vld [vmem:[#allocation2 + $0x4c8] sm:$0xf]
    %v1036 = vld [vmem:[#allocation2 + $0x4d0] sm:$0xf]
    %v1037 = vld [vmem:[#allocation2 + $0x4d8] sm:$0xf]
    %v1038 = vld [vmem:[#allocation2 + $0x4e0] sm:$0xf]
    %v1039 = vld [vmem:[#allocation2 + $0x4e8] sm:$0xf]
    %v1040 = vld [vmem:[#allocation2 + $0x4f0] sm:$0xf]
    %v1041 = vld [vmem:[#allocation2 + $0x4f8] sm:$0xf]
    %v1042 = vld [vmem:[#allocation2 + $0x550] sm:$0x1]
    %v1043 = vunpack.c.l.bf16 %v1042
    %v1044 = vlaneseq
    %v1045 = vshrl.u32 %v1044, 7
    %v1046 = vsub.s32 0, %v1045
    %v1047 = vrot.slane %v1043, %v1046
    %v1080 = vunpack.c.l.b16 %v1010
    %v1081 = vunpack.c.l.b16 %v1011
    %v1082 = vunpack.c.l.b16 %v1012
    %v1083 = vunpack.c.l.b16 %v1013
    %v1084 = vunpack.c.l.b16 %v1014
    %v1085 = vunpack.c.l.b16 %v1015
    %v1086 = vunpack.c.l.b16 %v1016
    %v1087 = vunpack.c.l.b16 %v1017
    %v1088 = vunpack.c.l.b16 %v1018
    %v1089 = vunpack.c.l.b16 %v1019
    %v1090 = vunpack.c.l.b16 %v1020
    %v1091 = vunpack.c.l.b16 %v1021
    %v1092 = vunpack.c.l.b16 %v1022
    %v1093 = vunpack.c.l.b16 %v1023
    %v1094 = vunpack.c.l.b16 %v1024
    %v1095 = vunpack.c.l.b16 %v1025
    %v1096 = vunpack.c.l.b16 %v1026
    %v1097 = vunpack.c.l.b16 %v1027
    %v1098 = vunpack.c.l.b16 %v1028
    %v1099 = vunpack.c.l.b16 %v1029
    %v1100 = vunpack.c.l.b16 %v1030
    %v1101 = vunpack.c.l.b16 %v1031
    %v1102 = vunpack.c.l.b16 %v1032
    %v1103 = vunpack.c.l.b16 %v1033
    %v1104 = vunpack.c.l.b16 %v1034
    %v1105 = vunpack.c.l.b16 %v1035
    %v1106 = vunpack.c.l.b16 %v1036
    %v1107 = vunpack.c.l.b16 %v1037
    %v1108 = vunpack.c.l.b16 %v1038
    %v1109 = vunpack.c.l.b16 %v1039
    %v1110 = vunpack.c.l.b16 %v1040
    %v1111 = vunpack.c.l.b16 %v1041
    %v1112 = vpack.c.b16 %v1081, %v1080
    %v1113 = vpack.c.b16 %v1083, %v1082
    %v1114 = vpack.c.b16 %v1085, %v1084
    %v1115 = vpack.c.b16 %v1087, %v1086
    %v1116 = vpack.c.b16 %v1089, %v1088
    %v1117 = vpack.c.b16 %v1091, %v1090
    %v1118 = vpack.c.b16 %v1093, %v1092
    %v1119 = vpack.c.b16 %v1095, %v1094
    %v1120 = vpack.c.b16 %v1097, %v1096
    %v1121 = vpack.c.b16 %v1099, %v1098
    %v1122 = vpack.c.b16 %v1101, %v1100
    %v1123 = vpack.c.b16 %v1103, %v1102
    %v1124 = vpack.c.b16 %v1105, %v1104
    %v1125 = vpack.c.b16 %v1107, %v1106
    %v1126 = vpack.c.b16 %v1109, %v1108
    %v1127 = vpack.c.b16 %v1111, %v1110
    %1144 = vmatprep.subr.bf16.mxu0 0
    %1145 = vmatpush1.bf16.msra.mxu0 %v1112
    %1146 = vmatprep.subr.bf16.mxu0 0
    %1147 = vmatpush1.bf16.msra.mxu0 %v1113
    %1148 = vmatprep.subr.bf16.mxu0 0
    %1149 = vmatpush1.bf16.msra.mxu0 %v1114
    %1150 = vmatprep.subr.bf16.mxu0 0
    %1151 = vmatpush1.bf16.msra.mxu0 %v1115
    %1152 = vmatprep.subr.bf16.mxu0 0
    %1153 = vmatpush1.bf16.msra.mxu0 %v1116
    %1154 = vmatprep.subr.bf16.mxu0 0
    %1155 = vmatpush1.bf16.msra.mxu0 %v1117
    %1156 = vmatprep.subr.bf16.mxu0 0
    %1157 = vmatpush1.bf16.msra.mxu0 %v1118
    %1158 = vmatprep.subr.bf16.mxu0 0
    %1159 = vmatpush1.bf16.msra.mxu0 %v1119
    %1160 = vmatprep.subr.bf16.mxu0 0
    %1161 = vmatpush1.bf16.msra.mxu0 %v1120
    %1162 = vmatprep.subr.bf16.mxu0 0
    %1163 = vmatpush1.bf16.msra.mxu0 %v1121
    %1164 = vmatprep.subr.bf16.mxu0 0
    %1165 = vmatpush1.bf16.msra.mxu0 %v1122
    %1166 = vmatprep.subr.bf16.mxu0 0
    %1167 = vmatpush1.bf16.msra.mxu0 %v1123
    %1168 = vmatprep.subr.bf16.mxu0 0
    %1169 = vmatpush1.bf16.msra.mxu0 %v1124
    %1170 = vmatprep.subr.bf16.mxu0 0
    %1171 = vmatpush1.bf16.msra.mxu0 %v1125
    %1172 = vmatprep.subr.bf16.mxu0 0
    %1173 = vmatpush1.bf16.msra.mxu0 %v1126
    %1174 = vmatprep.subr.bf16.mxu0 0
    %1175 = vmatpush1.bf16.msra.mxu0 %v1127
    %1176 = vmatprep.mubr.bf16.mxu0 %v1009
    %1177 = vmatmul.mubr.bf16.gmra.mrb[0].mxu0 %v1008
    %v1178 = vpop.f32.mrb[0].mxu0
    %v1179 = vadd.f32 %v1047, %v1178
    %v1180 = vpop.f32.mrb[0].mxu0
    %v1181 = vpop.f32.mrb[0].mxu0
    %v1182 = vpop.f32.mrb[0].mxu0
    %1183 = vdwg.mxu0
    %v1184 = vmax.f32 %v1179, 0.0
    %v1185 = vxor.u32 %v1184, 2147483648
    %v1186 = vmul.f32 %v1185, 1.442695
    %v1187 = vpow.pop %v1186
    %v1188 = vadd.f32 %v1187, 1.0
    %v1189 = vrcp.pop %v1188
    %v1190 = vmul.f32 1.0, %v1189
    %1191 = vst [vmem:[%s2] sm:$0xff] %v1190
    %1192 = vst [vmem:[%s2 + $0x8] sm:$0xff] %v598
    // Predicated region
    $region14: #{fwd.1} parent=1 // pred_check
      _
    $region15: #{fwd.1} parent=1 // pred_check_branch
      %1194 = sbr.rel (0) target = $region17
    $region16: #{fwd.1} parent=1 // pred_region
      _
    $region17: #{fwd.1} parent=1 // pred_fallthru
      _
    // Predicated region
    $region18: #{fwd.1} parent=1 // pred_check
      _
    $region19: #{fwd.1} parent=1 // pred_check_branch
      %1196 = sbr.rel (0) target = $region21
    $region20: #{fwd.1} parent=1 // pred_region
      _
    $region21: #{fwd.1} parent=1 // pred_fallthru
      _
    %1197 = vsyncpa [#allocation3], 1

</llo_original>
